<compile_context>
chip_gen: v7x
topology: tpu7x:2x2x1
jax: 0.10.0
libtpu: 0.0.40
codegen_flags: <defaults>
</compile_context>

<pallas_src>
import math

import jax
import jax.numpy as jnp
from jax.experimental import pallas as pl
from jax.experimental.pallas import tpu as pltpu

EPS = 1e-5
MAX_TILE_COLS = 4096      # columns (= rows of the original x) per grid step


def _round_up(x, m):
    return ((x + m - 1) // m) * m


# ---------------------------------------------------------------------------
# Kernel 1 (one per BN layer): [prev scale/shift + ReLU] -> Linear -> partial
# per-tile (sum, sumsq) of the pre-BN activation.  Feature-major.
# ---------------------------------------------------------------------------
def _make_linear_stats_kernel(apply_prev_bn, padded, n_real, tile_cols):
    def kernel(h_ref, w_ref, *rest):
        if apply_prev_bn:
            scale_ref, shift_ref, y_ref, stats_ref = rest
        else:
            y_ref, stats_ref = rest

        h = h_ref[...]                                      # (d_in, tile)
        if apply_prev_bn:
            # Previous layer's BatchNorm folded to one scale/shift, then ReLU.
            h = jnp.maximum(h * scale_ref[...] + shift_ref[...], 0.0)

        # Linear of this layer.  Bias is dropped: it is exactly cancelled by
        # the mean subtraction of the BatchNorm that follows.
        # (K = d_in is small for the first layer; MXU cadence is not the
        #  binding slot here, so a plain dot is kept.)
        y = jnp.dot(w_ref[...], h, preferred_element_type=jnp.float32)
        y_ref[...] = y                                      # cache pre-BN act.

        if padded:
            # Mask columns past the true batch size so zero-padding never
            # contaminates the batch statistics.
            t = pl.program_id(0)
            col = (jax.lax.broadcasted_iota(jnp.int32, (1, tile_cols), 1)
                   + t * tile_cols)
            ym = jnp.where(col < n_real, y, 0.0)
        else:
            ym = y

        psum = jnp.sum(ym, axis=1, keepdims=True)           # (d_out, 1)  XLU
        psq = jnp.sum(ym * ym, axis=1, keepdims=True)       # (d_out, 1)
        stats_ref[...] = jnp.concatenate([psum, psq], axis=1)[None]

    return kernel


def _linear_stats(h, w_t, scale, shift, n_real, tile, n_tiles):
    d_in, n_pad = h.shape
    d_out = w_t.shape[0]
    apply_prev = scale is not None
    padded = (n_pad != n_real)

    in_specs = [pl.BlockSpec((d_in, tile), lambda t: (0, t)),
                pl.BlockSpec((d_out, d_in), lambda t: (0, 0))]
    inputs = [h, w_t]
    if apply_prev:
        in_specs += [pl.BlockSpec((d_in, 1), lambda t: (0, 0)),
                     pl.BlockSpec((d_in, 1), lambda t: (0, 0))]
        inputs += [scale, shift]

    out_shapes = [jax.ShapeDtypeStruct((d_out, n_pad), jnp.float32),
                  jax.ShapeDtypeStruct((n_tiles, d_out, 2), jnp.float32)]
    out_specs = [pl.BlockSpec((d_out, tile), lambda t: (0, t)),
                 pl.BlockSpec((1, d_out, 2), lambda t: (t, 0, 0))]

    flops = 2 * n_pad * d_in * d_out + 8 * n_pad * d_out
    bytes_accessed = 4 * (d_in * n_pad + d_out * d_in + d_out * n_pad
                          + n_tiles * d_out * 2
                          + (2 * d_in if apply_prev else 0))

    y, stats = pl.pallas_call(
        _make_linear_stats_kernel(apply_prev, padded, n_real, tile),
        out_shape=out_shapes,
        grid_spec=pltpu.PrefetchScalarGridSpec(
            num_scalar_prefetch=0,
            grid=(n_tiles,),
            in_specs=in_specs,
            out_specs=out_specs),
        compiler_params=pltpu.CompilerParams(
            # Independent column tiles (per-tile partial stats are combined in
            # plain JAX afterwards) -> both TensorCores on v7x.
            dimension_semantics=("parallel",)),
        cost_estimate=pl.CostEstimate(flops=flops, transcendentals=0,
                                      bytes_accessed=bytes_accessed),
    )(*inputs)
    return y, stats


# ---------------------------------------------------------------------------
# Kernel 2: last BN scale/shift + ReLU -> final Linear (+bias).  Feature-major,
# lane-dense output (out_dim, n_pad).
# ---------------------------------------------------------------------------
def _make_final_kernel(apply_prev_bn):
    def kernel(h_ref, w_ref, b_ref, *rest):
        if apply_prev_bn:
            scale_ref, shift_ref, o_ref = rest
        else:
            (o_ref,) = rest
        h = h_ref[...]
        if apply_prev_bn:
            h = jnp.maximum(h * scale_ref[...] + shift_ref[...], 0.0)
        o = jnp.dot(w_ref[...], h, preferred_element_type=jnp.float32) + b_ref[...]
        o_ref[...] = o.astype(o_ref.dtype)
    return kernel


def _final_linear(h, w_t, b, scale, shift, tile, n_tiles):
    d_in, n_pad = h.shape
    d_out = w_t.shape[0]
    apply_prev = scale is not None

    in_specs = [pl.BlockSpec((d_in, tile), lambda t: (0, t)),
                pl.BlockSpec((d_out, d_in), lambda t: (0, 0)),
                pl.BlockSpec((d_out, 1), lambda t: (0, 0))]
    inputs = [h, w_t, b]
    if apply_prev:
        in_specs += [pl.BlockSpec((d_in, 1), lambda t: (0, 0)),
                     pl.BlockSpec((d_in, 1), lambda t: (0, 0))]
        inputs += [scale, shift]

    flops = 2 * n_pad * d_in * d_out + 4 * n_pad * d_in
    bytes_accessed = 4 * (d_in * n_pad + d_out * d_in + d_out + d_out * n_pad
                          + (2 * d_in if apply_prev else 0))

    return pl.pallas_call(
        _make_final_kernel(apply_prev),
        out_shape=jax.ShapeDtypeStruct((d_out, n_pad), jnp.float32),
        grid_spec=pltpu.PrefetchScalarGridSpec(
            num_scalar_prefetch=0,
            grid=(n_tiles,),
            in_specs=in_specs,
            out_specs=pl.BlockSpec((d_out, tile), lambda t: (0, t))),
        compiler_params=pltpu.CompilerParams(
            dimension_semantics=("parallel",)),
        cost_estimate=pl.CostEstimate(flops=flops, transcendentals=0,
                                      bytes_accessed=bytes_accessed),
    )(*inputs)


# ---------------------------------------------------------------------------
# Module: parameter init + forward
# ---------------------------------------------------------------------------
def init_pixel_set_mlp_params(key, input_dim, hidden_dims):
    """Linear i: weight [in, out] (PyTorch default uniform init), bias [out].
    BatchNorm1d i (all but last layer): gamma=1, beta=0 of shape [out]."""
    dims = [input_dim] + list(hidden_dims)
    params = []
    for i in range(len(dims) - 1):
        fan_in, fan_out = dims[i], dims[i + 1]
        key, kw, kb = jax.random.split(key, 3)
        bound = 1.0 / math.sqrt(fan_in)
        w = jax.random.uniform(kw, (fan_in, fan_out), jnp.float32, -bound, bound)
        b = jax.random.uniform(kb, (fan_out,), jnp.float32, -bound, bound)
        has_bn = i < len(dims) - 2
        params.append({
            "w": w, "b": b, "has_bn": has_bn,
            "gamma": jnp.ones((fan_out,), jnp.float32) if has_bn else None,
            "beta": jnp.zeros((fan_out,), jnp.float32) if has_bn else None,
        })
    return params


def pixel_set_mlp_forward(params, x, max_tile_cols=MAX_TILE_COLS):
    """x: [N, C] with N = B*T*S (same layout as the PyTorch module)."""
    n, _ = x.shape
    # Column-tile sizing: multiple of 128 lanes, >= 2 tiles when possible so
    # the "parallel" grid engages both TensorCores on v7x, capped so the
    # per-step VMEM footprint stays well inside the scoped default on v5e.
    n_tiles = max(pl.cdiv(n, max_tile_cols), 2 if n > 128 else 1)
    tile = _round_up(pl.cdiv(n, n_tiles), 128)
    n_tiles = pl.cdiv(n, tile)
    n_pad = tile * n_tiles

    # One-time layout plumbing: feature-major (C, N), zero-pad the lane dim.
    h = jnp.pad(x.astype(jnp.float32).T, ((0, 0), (0, n_pad - n)))

    scale = shift = None
    for layer in params[:-1]:
        assert layer["has_bn"]
        y, stats = _linear_stats(h, layer["w"].T, scale, shift, n, tile, n_tiles)
        # Fold global batch statistics -> per-channel (scale, shift): tiny JAX.
        tot = jnp.sum(stats, axis=0)                    # (d_out, 2)
        mean = tot[:, 0] / n
        var = jnp.maximum(tot[:, 1] / n - mean * mean, 0.0)   # biased variance
        s = layer["gamma"] * jax.lax.rsqrt(var + EPS)
        scale, shift = s[:, None], (layer["beta"] - mean * s)[:, None]
        h = y                                           # cached pre-BN act.

    last = params[-1]
    out = _final_linear(h, last["w"].T, last["b"][:, None], scale, shift,
                        tile, n_tiles)
    return out.T[:n]                                    # back to [N, out_dim]


# ---------------------------------------------------------------------------
# Pure-JAX reference (faithful to the PyTorch forward, incl. pre-BN biases)
# ---------------------------------------------------------------------------
def pixel_set_mlp_reference(params, x):
    h = x
    for layer in params:
        y = h @ layer["w"] + layer["b"]
        if layer["has_bn"]:
            mean = jnp.mean(y, axis=0)
            var = jnp.mean((y - mean) ** 2, axis=0)     # biased
            y = (y - mean) * jax.lax.rsqrt(var + EPS)
            y = y * layer["gamma"] + layer["beta"]
            y = jnp.maximum(y, 0.0)
        h = y
    return h


if __name__ == "__main__":
    # B=2 batches, T=8 time steps, S=16 pixels, C=4 channels  ->  N = 256 rows
    B, T, S, C = 2, 8, 16, 4
    N = B * T * S
    hidden_dims = [32, 64, 16]

    key = jax.random.PRNGKey(0)
    key, kx = jax.random.split(key)
    x = jax.random.normal(kx, (N, C), jnp.float32)
    params = init_pixel_set_mlp_params(key, C, hidden_dims)

    out = jax.block_until_ready(pixel_set_mlp_forward(params, x))
    ref = pixel_set_mlp_reference(params, x)
    assert out.shape == (N, hidden_dims[-1])
    assert jnp.allclose(out, ref, atol=1e-4, rtol=1e-4), "mismatch vs reference"

    # Ragged batch (N not a multiple of 128): exercises the padded-column mask
    # and multi-tile partial-statistics paths.
    N2 = 2 * 8 * 13   # 208
    x2 = jax.random.normal(jax.random.PRNGKey(1), (N2, C), jnp.float32)
    out2 = jax.block_until_ready(pixel_set_mlp_forward(params, x2))
    ref2 = pixel_set_mlp_reference(params, x2)
    assert out2.shape == (N2, hidden_dims[-1])
    assert jnp.allclose(out2, ref2, atol=1e-4, rtol=1e-4), "mismatch (ragged)"

    print("KERNEL_OK")
</pallas_src>

<mosaic_0001>
module attributes {stable_mosaic.version = 11 : i64} {
  func.func @kernel(%arg0: i32, %arg1: memref<4x128xf32, #tpu.memory_space<vmem>>, %arg2: memref<32x4xf32, #tpu.memory_space<vmem>>, %arg3: memref<32x128xf32, #tpu.memory_space<vmem>>, %arg4: memref<1x32x2xf32, #tpu.memory_space<vmem>>) attributes {dimension_semantics = [#tpu.dimension_semantics<parallel>], iteration_bounds = array<i64: 2>, scalar_prefetch = 0 : i64, scratch_operands = 0 : i64, tpu.core_type = #tpu.core_type<tc>, window_params = [{transform_indices = @transform_0, window_bounds = array<i64: 4, 128>}, {pipeline_mode = #tpu.pipeline_mode<synchronous>, transform_indices = @transform_1, window_bounds = array<i64: 32, 4>}, {transform_indices = @transform_2, window_bounds = array<i64: 32, 128>}, {transform_indices = @transform_3, window_bounds = array<i64: 1, 32, 2>}]} {
    %c0 = arith.constant 0 : index
    %c0_0 = arith.constant 0 : index
    %0 = vector.load %arg1[%c0, %c0_0] : memref<4x128xf32, #tpu.memory_space<vmem>>, vector<4x128xf32>
    %c0_1 = arith.constant 0 : index
    %c0_2 = arith.constant 0 : index
    %1 = vector.load %arg2[%c0_1, %c0_2] : memref<32x4xf32, #tpu.memory_space<vmem>>, vector<32x4xf32>
    %cst = arith.constant dense<0.000000e+00> : vector<32x128xf32>
    %2 = tpu.matmul %1, %0, %cst {dimension_numbers = #tpu.dot_dimension_numbers<[1], [0], [0], [1], [0, 0, 1, 1], [], []>} : vector<32x4xf32>, vector<4x128xf32>, vector<32x128xf32> -> vector<32x128xf32>
    %c0_3 = arith.constant 0 : index
    %c0_4 = arith.constant 0 : index
    %3 = vector.load %arg3[%c0_3, %c0_4] : memref<32x128xf32, #tpu.memory_space<vmem>>, vector<32x128xf32>
    tpu.vector_store %arg3[%c0_3, %c0_4], %2 {strides = array<i32>} : memref<32x128xf32, #tpu.memory_space<vmem>>, vector<32x128xf32>,
    %cst_5 = arith.constant dense<0.000000e+00> : vector<32xf32>
    %4 = vector.multi_reduction <add>, %2, %cst_5 [1] : vector<32x128xf32> to vector<32xf32>
    %5 = vector.shape_cast %4 : vector<32xf32> to vector<32x1xf32>
    %6 = arith.mulf %2, %2 : vector<32x128xf32>
    %cst_6 = arith.constant dense<0.000000e+00> : vector<32xf32>
    %7 = vector.multi_reduction <add>, %6, %cst_6 [1] : vector<32x128xf32> to vector<32xf32>
    %8 = vector.shape_cast %7 : vector<32xf32> to vector<32x1xf32>
    %9 = tpu.concatenate %5, %8 in 1 : vector<32x1xf32>, vector<32x1xf32> -> vector<32x2xf32>
    %10 = vector.shape_cast %9 : vector<32x2xf32> to vector<1x32x2xf32>
    %c0_7 = arith.constant 0 : index
    %c0_8 = arith.constant 0 : index
    %c0_9 = arith.constant 0 : index
    %11 = vector.load %arg4[%c0_7, %c0_8, %c0_9] : memref<1x32x2xf32, #tpu.memory_space<vmem>>, vector<1x32x2xf32>
    tpu.vector_store %arg4[%c0_7, %c0_8, %c0_9], %10 {strides = array<i32>} : memref<1x32x2xf32, #tpu.memory_space<vmem>>, vector<1x32x2xf32>,
    return
  }
  func.func @transform_0(%arg0: i32) -> (i32, i32) {
    %c0_i32 = arith.constant 0 : i32
    %c0_i32_0 = arith.constant 0 : i32
    return %c0_i32, %arg0 : i32, i32
  }
  func.func @transform_1(%arg0: i32) -> (i32, i32) {
    %c0_i32 = arith.constant 0 : i32
    %c0_i32_0 = arith.constant 0 : i32
    %c0_i32_1 = arith.constant 0 : i32
    return %c0_i32, %c0_i32_0 : i32, i32
  }
  func.func @transform_2(%arg0: i32) -> (i32, i32) {
    %c0_i32 = arith.constant 0 : i32
    %c0_i32_0 = arith.constant 0 : i32
    return %c0_i32, %arg0 : i32, i32
  }
  func.func @transform_3(%arg0: i32) -> (i32, i32, i32) {
    %c0_i32 = arith.constant 0 : i32
    %c0_i32_0 = arith.constant 0 : i32
    %c0_i32_1 = arith.constant 0 : i32
    return %arg0, %c0_i32, %c0_i32_0 : i32, i32, i32
  }
}

</mosaic_0001>

<llo_original>
// kernel: tpu_custom_call.1
$region0: #{tpu_custom_call.1}
  #allocation0 [shape = 'u32[]', space=smem, size = 0x4, offset = 0x4, fixed_abs, tag = 'smem constant byte address 0x4 - core index']
  #allocation1 [shape = 'u32[144,128]{1,0:T(1,128)}', space=vmem, size = 0x12000, scoped, tag = 'internal scratch']
  %s0 = inlined_call_operand.vmem [shape: f32[4,256], index: 0, kind: input, shape index: {}]
  %s1 = inlined_call_operand.vmem [shape: f32[32,4], index: 1, kind: input, shape index: {}]
  %s2 = inlined_call_operand.hbm [shape: f32[32,256], index: 2, kind: output, shape index: {0}]
  %s3 = inlined_call_operand.vmem [shape: f32[2,32,2], index: 3, kind: output, shape index: {1}]
  %4 = xla_tuple %s2, %s3
  %s5 = sld [smem:[#allocation0]]
  $region49: #{tpu_custom_call.1} parent=0
    _
  %s7 = ssub.s32 1, %s5
  %s8 = scalar_select 0, %s7, %s5
  $region1: #{tpu_custom_call.1} parent=0
    #allocation2 [shape = 'u8[32768]{0}', space=vmem, size = 0x8000, scoped, tag = 'output window, operand 0']
    #allocation3 [shape = 's32[2]{0}', space=sflag, size = 0x8, scoped, tag = 'scoped memory for tpu_custom_call.1']
    %9 = vsyncpa [#allocation3], 0
    %s10 = scalar_lea.sflag [#allocation3], 1
    %11 = vsyncpa %s10, 0
    loop: start=0, step=1, limit=4
    $region2: #{tpu_custom_call.1} parent=1 // loop_pre_header
      _
    $region3: #{tpu_custom_call.1} parent=1 // loop_header
      %s13 = sphi 0, %s17
      %p14 = scmp.ge.s32.totalorder %s13, 4
      %s23 = sphi 0, %s25
      %s26 = sphi 0, %s23
      %s27 = sphi 0, %s26
      %s43 = sphi 0, %s27
      %s47 = sphi 0, %s47
      %s49 = sphi 0, %s47
      %s50 = sphi 0, %s49
      %s64 = sphi 0, %s50
      %s70 = sphi 0, %s72
      %s73 = sphi 0, %s70
      %s74 = sphi 0, %s73
      %s90 = sphi 0, %s74
      %s96 = sphi 0, %s98
      %s99 = sphi 0, %s96
      %s100 = sphi 0, %s99
      %s116 = sphi 0, %s100
    $region4: #{tpu_custom_call.1} parent=1 // loop_header_branch
      %16 = sbr.rel (%p14) target = $region8
    $region5: #{tpu_custom_call.1} parent=1 // loop_body
      %s18 = ssub.s32 %s13, 1
      %s19 = ssub.s32 %s13, 2
      %s20 = sadd.s32 %s13, 1
      %s21 = ssub.s32 %s13, %s20
      %p22 = scmp.eq.s32.totalorder %s21, 0
      %s24 = sadd.s32 %s23, 1
      %s25 = scalar_select %p22, %s23, %s24
      %p28 = pneg %p22
      %p29 = scmp.eq.s32.totalorder %s13, 1
      %p30 = por %p28, %p29
      %p31 = scmp.ne.s32.totalorder %s23, %s26
      %p32 = scmp.eq.s32.totalorder %s13, 0
      %p33 = por %p31, %p32
      %p34 = scmp.ne.s32.totalorder %s23, %s26
      %p35 = scmp.eq.s32.totalorder %s18, 1
      %p36 = por %p34, %p35
      %p37 = scmp.ne.s32.totalorder %s26, %s27
      %p38 = scmp.eq.s32.totalorder %s18, 0
      %p39 = por %p37, %p38
      %p40 = scmp.ne.s32.totalorder %s26, %s27
      %p41 = scmp.eq.s32.totalorder %s19, 1
      %p42 = por %p40, %p41
      %p44 = scmp.ne.s32.totalorder %s27, %s43
      %p45 = scmp.eq.s32.totalorder %s19, 0
      %p46 = por %p44, %p45
      %s48 = sadd.s32 %s47, 1
      %p51 = scmp.eq.s32.totalorder %s13, 1
      %p52 = scmp.ne.s32.totalorder %s47, %s49
      %p53 = scmp.eq.s32.totalorder %s13, 0
      %p54 = por %p52, %p53
      %p55 = scmp.ne.s32.totalorder %s47, %s49
      %p56 = scmp.eq.s32.totalorder %s18, 1
      %p57 = por %p55, %p56
      %p58 = scmp.ne.s32.totalorder %s49, %s50
      %p59 = scmp.eq.s32.totalorder %s18, 0
      %p60 = por %p58, %p59
      %p61 = scmp.ne.s32.totalorder %s49, %s50
      %p62 = scmp.eq.s32.totalorder %s19, 1
      %p63 = por %p61, %p62
      %p65 = scmp.ne.s32.totalorder %s50, %s64
      %p66 = scmp.eq.s32.totalorder %s19, 0
      %p67 = por %p65, %p66
      %s68 = ssub.s32 %s13, %s20
      %p69 = scmp.eq.s32.totalorder %s68, 0
      %s71 = sadd.s32 %s70, 1
      %s72 = scalar_select %p69, %s70, %s71
      %p75 = pneg %p69
      %p76 = scmp.eq.s32.totalorder %s13, 1
      %p77 = por %p75, %p76
      %p78 = scmp.ne.s32.totalorder %s70, %s73
      %p79 = scmp.eq.s32.totalorder %s13, 0
      %p80 = por %p78, %p79
      %p81 = scmp.ne.s32.totalorder %s70, %s73
      %p82 = scmp.eq.s32.totalorder %s18, 1
      %p83 = por %p81, %p82
      %p84 = scmp.ne.s32.totalorder %s73, %s74
      %p85 = scmp.eq.s32.totalorder %s18, 0
      %p86 = por %p84, %p85
      %p87 = scmp.ne.s32.totalorder %s73, %s74
      %p88 = scmp.eq.s32.totalorder %s19, 1
      %p89 = por %p87, %p88
      %p91 = scmp.ne.s32.totalorder %s74, %s90
      %p92 = scmp.eq.s32.totalorder %s19, 0
      %p93 = por %p91, %p92
      %s94 = ssub.s32 %s13, %s20
      %p95 = scmp.eq.s32.totalorder %s94, 0
      %s97 = sadd.s32 %s96, 1
      %s98 = scalar_select %p95, %s96, %s97
      %p101 = pneg %p95
      %p102 = scmp.eq.s32.totalorder %s13, 1
      %p103 = por %p101, %p102
      %p104 = scmp.ne.s32.totalorder %s96, %s99
      %p105 = scmp.eq.s32.totalorder %s13, 0
      %p106 = por %p104, %p105
      %p107 = scmp.ne.s32.totalorder %s96, %s99
      %p108 = scmp.eq.s32.totalorder %s18, 1
      %p109 = por %p107, %p108
      %p110 = scmp.ne.s32.totalorder %s99, %s100
      %p111 = scmp.eq.s32.totalorder %s18, 0
      %p112 = por %p110, %p111
      %p113 = scmp.ne.s32.totalorder %s99, %s100
      %p114 = scmp.eq.s32.totalorder %s19, 1
      %p115 = por %p113, %p114
      %p117 = scmp.ne.s32.totalorder %s100, %s116
      %p118 = scmp.eq.s32.totalorder %s19, 0
      %p119 = por %p117, %p118
      %p120 = scmp.le.s32.totalorder 1, %s13
      %p121 = scmp.lt.s32.totalorder %s13, 3
      %p122 = pnand %p120, %p121
      %p123 = pneg %p122
      // Predicated region
      $region9: #{tpu_custom_call.1} parent=5 // pred_check
        _
      $region10: #{tpu_custom_call.1} parent=5 // pred_check_branch
        %125 = sbr.rel (%p122) target = $region12
      $region11: #{tpu_custom_call.1} parent=5 // pred_region
        %s126 = ssub.s32 %s13, 1
        // Predicated region
        $region13: #{tpu_custom_call.1} parent=11 // pred_check
          %p127 = pneg %p60
        $region14: #{tpu_custom_call.1} parent=11 // pred_check_branch
          %129 = sbr.rel (%p127) target = $region16
        $region15: #{tpu_custom_call.1} parent=11 // pred_region
          _
        $region16: #{tpu_custom_call.1} parent=11 // pred_fallthru
          _
      $region12: #{tpu_custom_call.1} parent=5 // pred_fallthru
        _
      %p130 = scmp.lt.s32.totalorder %s13, 2
      // Predicated region
      $region17: #{tpu_custom_call.1} parent=5 // pred_check
        %p131 = pneg %p130
      $region18: #{tpu_custom_call.1} parent=5 // pred_check_branch
        %133 = sbr.rel (%p131) target = $region20
      $region19: #{tpu_custom_call.1} parent=5 // pred_region
        // Predicated region
        $region21: #{tpu_custom_call.1} parent=19 // pred_check
          %p134 = pneg %p33
        $region22: #{tpu_custom_call.1} parent=19 // pred_check_branch
          %136 = sbr.rel (%p134) target = $region24
        $region23: #{tpu_custom_call.1} parent=19 // pred_region
          %p137 = scmp.lt.s32.totalorder %s13, 1
          %s138 = scalar_select %p137, %s13, 1
          %s139 = smul.addr %s138, 4
          %s140 = scalar_lea.vmem %s0, %s139
        $region24: #{tpu_custom_call.1} parent=19 // pred_fallthru
          _
      $region20: #{tpu_custom_call.1} parent=5 // pred_fallthru
        _
      %p141 = scmp.le.s32.totalorder 1, %s13
      %p142 = scmp.lt.s32.totalorder %s13, 3
      %p143 = pnand %p141, %p142
      %p144 = pneg %p143
      // Predicated region
      $region25: #{tpu_custom_call.1} parent=5 // pred_check
        _
      $region26: #{tpu_custom_call.1} parent=5 // pred_check_branch
        %146 = sbr.rel (%p143) target = $region28
      $region27: #{tpu_custom_call.1} parent=5 // pred_region
        %s147 = ssub.s32 %s13, 1
        %p148 = scmp.lt.s32.totalorder %s18, 1
        %s149 = scalar_select %p148, %s18, 1
        %s150 = smul.addr %s149, 4
        %s151 = scalar_lea.vmem %s0, %s150
        %p152 = pneg %p39
        %p153 = pneg %p36
        %p154 = pneg %p60
        %p155 = pneg %p57
        %p156 = pneg %p86
        %p157 = pneg %p83
        %s158 = sand.u32 %s73, 1
        %s159 = scalar_lea.sflag [#allocation3], %s158
        %s160 = sand.u32 %s73, 1
        %s161 = smul.addr %s160, 32
        %s162 = scalar_lea.vmem [#allocation2], %s161
        %p163 = pneg %p112
        %p164 = pneg %p109
        %p165 = scmp.lt.s32.totalorder %s18, 1
        %s166 = scalar_select %p165, %s18, 1
        %s167 = smul.addr %s166, 4
        %s168 = smul.addr %s167, 8
        %s169 = scalar_lea.vmem %s3, %s168
        %p170 = scmp.lt.s32.totalorder %s18, 1
        %s171 = scalar_select %p170, %s18, 1
        %s172 = smul.addr %s171, 4
        %s173 = scalar_lea.vmem %s0, %s172
        %p174 = scmp.lt.s32.totalorder %s18, 1
        %s175 = scalar_select %p174, %s18, 1
        %s176 = smul.addr %s175, 4
        %s177 = smul.addr %s176, 8
        %s178 = scalar_lea.vmem %s3, %s177
        %v179 = vld [vmem:[%s173] sm:$0xf]
        %v180 = vld [vmem:[%s1] sm:$0xff]
        %v181 = vld [vmem:[%s1 + $0x8] sm:$0xff]
        %v182 = vld [vmem:[%s1 + $0x10] sm:$0xff]
        %v183 = vld [vmem:[%s1 + $0x18] sm:$0xff]
        %vm184 = vcmask 31744
        %v186 = vsel %vm184, %v180, 0
        %v189 = vsel %vm184, %v181, 0
        %v192 = vsel %vm184, %v182, 0
        %v195 = vsel %vm184, %v183, 0
        %vm197 = vcmask 1043456
        %v199 = vsel %vm197, %v179, 0
        %201 = vmatprep.subr.mxu0 0.0
        %202 = vmatpush1.msra.mxu0 %v199
        %203 = vmatprep.subr.mxu0 0.0
        %204 = vmatpush1.msra.mxu0 0.0
        %205 = vmatprep.subr.mxu0 0.0
        %206 = vmatpush1.msra.mxu0 0.0
        %207 = vmatprep.subr.mxu0 0.0
        %208 = vmatpush1.msra.mxu0 0.0
        %209 = vmatprep.subr.mxu0 0.0
        %210 = vmatpush1.msra.mxu0 0.0
        %211 = vmatprep.subr.mxu0 0.0
        %212 = vmatpush1.msra.mxu0 0.0
        %213 = vmatprep.subr.mxu0 0.0
        %214 = vmatpush1.msra.mxu0 0.0
        %215 = vmatprep.subr.mxu0 0.0
        %216 = vmatpush1.msra.mxu0 0.0
        %217 = vmatprep.subr.mxu0 0.0
        %218 = vmatpush1.msra.mxu0 0.0
        %219 = vmatprep.subr.mxu0 0.0
        %220 = vmatpush1.msra.mxu0 0.0
        %221 = vmatprep.subr.mxu0 0.0
        %222 = vmatpush1.msra.mxu0 0.0
        %223 = vmatprep.subr.mxu0 0.0
        %224 = vmatpush1.msra.mxu0 0.0
        %225 = vmatprep.subr.mxu0 0.0
        %226 = vmatpush1.msra.mxu0 0.0
        %227 = vmatprep.subr.mxu0 0.0
        %228 = vmatpush1.msra.mxu0 0.0
        %229 = vmatprep.subr.mxu0 0.0
        %230 = vmatpush1.msra.mxu0 0.0
        %231 = vmatprep.subr.mxu0 0.0
        %232 = vmatpush1.msra.mxu0 0.0
        %233 = vmatprep.subr.mxu0 0.0
        %234 = vmatpush1.msra.mxu0 0.0
        %235 = vmatprep.subr.mxu0 0.0
        %236 = vmatpush1.msra.mxu0 0.0
        %237 = vmatprep.subr.mxu0 0.0
        %238 = vmatpush1.msra.mxu0 0.0
        %239 = vmatprep.subr.mxu0 0.0
        %240 = vmatpush1.msra.mxu0 0.0
        %241 = vmatprep.subr.mxu0 0.0
        %242 = vmatpush1.msra.mxu0 0.0
        %243 = vmatprep.subr.mxu0 0.0
        %244 = vmatpush1.msra.mxu0 0.0
        %245 = vmatprep.subr.mxu0 0.0
        %246 = vmatpush1.msra.mxu0 0.0
        %247 = vmatprep.subr.mxu0 0.0
        %248 = vmatpush1.msra.mxu0 0.0
        %249 = vmatprep.subr.mxu0 0.0
        %250 = vmatpush1.msra.mxu0 0.0
        %251 = vmatprep.subr.mxu0 0.0
        %252 = vmatpush1.msra.mxu0 0.0
        %253 = vmatprep.subr.mxu0 0.0
        %254 = vmatpush1.msra.mxu0 0.0
        %255 = vmatprep.subr.mxu0 0.0
        %256 = vmatpush1.msra.mxu0 0.0
        %257 = vmatprep.subr.mxu0 0.0
        %258 = vmatpush1.msra.mxu0 0.0
        %259 = vmatprep.subr.mxu0 0.0
        %260 = vmatpush1.msra.mxu0 0.0
        %261 = vmatprep.subr.mxu0 0.0
        %262 = vmatpush1.msra.mxu0 0.0
        %263 = vmatprep.subr.mxu0 0.0
        %264 = vmatpush1.msra.mxu0 0.0
        %265 = vmatprep.mubr.f32.mxu0 0.0
        %266 = vmatmul.mubr.f32.gmra.mrb[0].mxu0 %v186
        %v267 = vpop.f32.mrb[0].mxu0
        %v268 = vadd.f32 0.0, %v267
        %v269 = vpop.f32.mrb[0].mxu0
        %270 = vmatprep.mubr.f32.mxu0 0.0
        %271 = vmatmul.mubr.f32.gmra.mrb[0].mxu0 %v189
        %v272 = vpop.f32.mrb[0].mxu0
        %v273 = vadd.f32 0.0, %v272
        %v274 = vpop.f32.mrb[0].mxu0
        %275 = vmatprep.mubr.f32.mxu0 0.0
        %276 = vmatmul.mubr.f32.gmra.mrb[0].mxu0 %v192
        %v277 = vpop.f32.mrb[0].mxu0
        %v278 = vadd.f32 0.0, %v277
        %v279 = vpop.f32.mrb[0].mxu0
        %280 = vmatprep.mubr.f32.mxu0 0.0
        %281 = vmatmul.mubr.f32.gmra.mrb[0].mxu0 %v195
        %v282 = vpop.f32.mrb[0].mxu0
        %v283 = vadd.f32 0.0, %v282
        %v284 = vpop.f32.mrb[0].mxu0
        %285 = vdwg.mxu0
        %286 = vst [vmem:[%s162] sm:$0xff] %v268
        %287 = vst [vmem:[%s162 + $0x8] sm:$0xff] %v273
        %288 = vst [vmem:[%s162 + $0x10] sm:$0xff] %v278
        %289 = vst [vmem:[%s162 + $0x18] sm:$0xff] %v283
        %290 = vadd.xlane.f32.xlu0 %v268
        %v291 = vpop.xlane.xlu0 %290
        %292 = vadd.xlane.f32.xlu0 %v273
        %v293 = vpop.xlane.xlu0 %292
        %294 = vadd.xlane.f32.xlu0 %v278
        %v295 = vpop.xlane.xlu0 %294
        %296 = vadd.xlane.f32.xlu0 %v283
        %v297 = vpop.xlane.xlu0 %296
        %v298 = vmul.f32 %v268, %v268
        %v299 = vmul.f32 %v273, %v273
        %v300 = vmul.f32 %v278, %v278
        %v301 = vmul.f32 %v283, %v283
        %302 = vadd.xlane.f32.xlu0 %v298
        %v303 = vpop.xlane.xlu0 %302
        %304 = vadd.xlane.f32.xlu0 %v299
        %v305 = vpop.xlane.xlu0 %304
        %306 = vadd.xlane.f32.xlu0 %v300
        %v307 = vpop.xlane.xlu0 %306
        %308 = vadd.xlane.f32.xlu0 %v301
        %v309 = vpop.xlane.xlu0 %308
        %vm310 = vcmask 7168
        %v311 = vsel %vm310, %v291, %v303
        %v312 = vsel %vm310, %v293, %v305
        %v313 = vsel %vm310, %v295, %v307
        %v314 = vsel %vm310, %v297, %v309
        %vm315 = vcmask 15360
        %316 = vst.msk [vmem:[%s178] sm:$0xff] %vm315, %v311
        %317 = vst.msk [vmem:[%s178 + $0x8] sm:$0xff] %vm315, %v312
        %318 = vst.msk [vmem:[%s178 + $0x10] sm:$0xff] %vm315, %v313
        %319 = vst.msk [vmem:[%s178 + $0x18] sm:$0xff] %vm315, %v314
        %s320 = sand.u32 %s73, 1
        %s321 = scalar_lea.sflag [#allocation3], %s320
        %s322 = sand.u32 %s73, 1
        %s323 = smul.addr %s322, 32
        %s324 = scalar_lea.vmem [#allocation2], %s323
        %p325 = scmp.lt.s32.totalorder %s18, 1
        %s326 = scalar_select %p325, %s18, 1
        %s327 = smul.addr %s326, 4
        %s328 = smul.addr %s327, 8
        %s329 = scalar_lea.vmem %s3, %s328
        // Predicated region
        $region29: #{tpu_custom_call.1} parent=27 // pred_check
          %p330 = pneg %p83
        $region30: #{tpu_custom_call.1} parent=27 // pred_check_branch
          %332 = sbr.rel (%p330) target = $region32
        $region31: #{tpu_custom_call.1} parent=27 // pred_region
          %s334 = ssub.s32 512, 512
          %335 = vsyncadd %s321, %s334
          %s336 = smul.addr %s18, 128
          %s337 = scalar_lea.hbm %s2, %s336
          %s338 = sshll.u32 %s324, 4
          %s339 = int_to_ptr.vmem [resolvable:$true] %s338
          %344 = dma.vmem_to_hbm [thread:$0]  %s339, 512, %s337, %s321, 128, 256, 8
        $region32: #{tpu_custom_call.1} parent=27 // pred_fallthru
          _
        // Predicated region
        $region33: #{tpu_custom_call.1} parent=27 // pred_check
          %p345 = pneg %p109
        $region34: #{tpu_custom_call.1} parent=27 // pred_check_branch
          %347 = sbr.rel (%p345) target = $region36
        $region35: #{tpu_custom_call.1} parent=27 // pred_region
          _
        $region36: #{tpu_custom_call.1} parent=27 // pred_fallthru
          _
      $region28: #{tpu_custom_call.1} parent=5 // pred_fallthru
        _
      %p348 = scmp.le.s32.totalorder 2, %s13
      // Predicated region
      $region37: #{tpu_custom_call.1} parent=5 // pred_check
        %p349 = pneg %p348
      $region38: #{tpu_custom_call.1} parent=5 // pred_check_branch
        %351 = sbr.rel (%p349) target = $region40
      $region39: #{tpu_custom_call.1} parent=5 // pred_region
        %s352 = ssub.s32 %s13, 2
        // Predicated region
        $region41: #{tpu_custom_call.1} parent=39 // pred_check
          %p353 = pneg %p89
        $region42: #{tpu_custom_call.1} parent=39 // pred_check_branch
          %355 = sbr.rel (%p353) target = $region44
        $region43: #{tpu_custom_call.1} parent=39 // pred_region
          %s356 = sand.u32 %s74, 1
          %s357 = scalar_lea.sflag [#allocation3], %s356
          %s358 = sand.u32 %s74, 1
          %s359 = smul.addr %s358, 32
          %s360 = scalar_lea.vmem [#allocation2], %s359
          %361 = dma.done %s357, 512
        $region44: #{tpu_custom_call.1} parent=39 // pred_fallthru
          _
        // Predicated region
        $region45: #{tpu_custom_call.1} parent=39 // pred_check
          %p362 = pneg %p115
        $region46: #{tpu_custom_call.1} parent=39 // pred_check_branch
          %364 = sbr.rel (%p362) target = $region48
        $region47: #{tpu_custom_call.1} parent=39 // pred_region
          %p365 = scmp.lt.s32.totalorder %s19, 1
          %s366 = scalar_select %p365, %s19, 1
          %s367 = smul.addr %s366, 4
          %s368 = smul.addr %s367, 8
          %s369 = scalar_lea.vmem %s3, %s368
        $region48: #{tpu_custom_call.1} parent=39 // pred_fallthru
          _
      $region40: #{tpu_custom_call.1} parent=5 // pred_fallthru
        _
    $region6: #{tpu_custom_call.1} parent=1 // loop_footer
      %s17 = sadd.s32 1, %s13
    $region7: #{tpu_custom_call.1} parent=1 // loop_footer_branch
      %12 = sbr.rel target = $region3
    $region8: #{tpu_custom_call.1} parent=1 // loop_exit
      _
    %370 = vsyncpa [#allocation3], 1
    %s371 = scalar_lea.sflag [#allocation3], 1
    %372 = vsyncpa %s371, 1

</llo_original>
